<compile_context>
chip_gen: v7x
topology: tpu7x:2x2x1
jax: 0.10.0
libtpu: 0.0.40
codegen_flags: <defaults>
</compile_context>

<pallas_src>
import jax
import jax.numpy as jnp
from jax.experimental import pallas as pl
from jax.experimental.pallas import tpu as pltpu

_LANE = 128
_SUBLANE = 8
_MAX_TILE_M = 512
_MAX_TILE_N = 512


def _round_up(x, m):
    return ((x + m - 1) // m) * m


def encoder_kernel(x_ref, w_ref, b_ref, o_ref):
    """o = relu(x @ W + b) for one (tm, tn) output tile.

    x_ref: (tm, k_rows) f32, w_ref: (k_rows, tn) bf16, b_ref: (1, tn) f32.
    """
    x = x_ref[...].astype(jnp.bfloat16)                 # bf16 operands -> MXU peak
    h = jnp.dot(x, w_ref[...], preferred_element_type=jnp.float32)
    h = h + b_ref[...]                                   # bias add stays f32
    o_ref[...] = jnp.maximum(h, 0.0).astype(o_ref.dtype)


def pack_encoder_params(w, b):
    """Pack W (in, out) -> bf16 (round_up(in,8), round_up(out,128)) slab and
    b (out,) -> f32 (1, round_up(out,128)).  Padding is zeros (inert)."""
    k_in, n_out = w.shape
    k_rows = _round_up(k_in, _SUBLANE)
    n_pad = _round_up(n_out, _LANE)
    w_p = jnp.zeros((k_rows, n_pad), jnp.bfloat16)
    w_p = w_p.at[:k_in, :n_out].set(w.astype(jnp.bfloat16))
    b_p = jnp.zeros((1, n_pad), jnp.float32)
    b_p = b_p.at[0, :n_out].set(jnp.reshape(b, (-1,)).astype(jnp.float32))
    return w_p, b_p


def _choose_tile_m(batch):
    """Sublane-padded batch and the largest tile (mult of 8, <=512) dividing it,
    preferring >=2 grid steps so v7x megacore sharding kicks in."""
    m_pad = _round_up(max(batch, 1), _SUBLANE)
    if m_pad < 2 * _SUBLANE:
        return m_pad, m_pad
    target = min(_MAX_TILE_M, _round_up((m_pad + 1) // 2, _SUBLANE))
    tm = _SUBLANE
    t = _SUBLANE
    while t <= target:
        if m_pad % t == 0:
            tm = t
        t += _SUBLANE
    return m_pad, tm


def _choose_tile_n(n_pad):
    """Largest multiple of 128 (<=512) that exactly divides the padded N."""
    tn = _LANE
    t = _LANE
    while t <= min(_MAX_TILE_N, n_pad):
        if n_pad % t == 0:
            tn = t
        t += _LANE
    return tn


def encoder_forward(x, w_packed, b_packed, n_out):
    """x: (batch, k_in) f32; params from pack_encoder_params; returns f32 (batch, n_out)."""
    batch, k_in = x.shape
    k_rows, n_pad = w_packed.shape

    m_pad, tm = _choose_tile_m(batch)
    tn = _choose_tile_n(n_pad)

    if m_pad != batch or k_rows != k_in:
        x = jnp.pad(x, ((0, m_pad - batch), (0, k_rows - k_in)))

    grid = (m_pad // tm, n_pad // tn)

    # Scoped-VMEM budget: double-buffered x / W / bias / out tiles, then
    # headroom; clamped to stay portable (>= v5e's 16 MiB default, well under
    # v7x's 64 MiB physical VMEM).
    tile_bytes = 2 * (tm * k_rows * 4          # x tile (f32)
                      + k_rows * tn * 2        # W tile (bf16)
                      + _SUBLANE * tn * 4      # bias tile (f32, sublane-padded)
                      + tm * tn * 4)           # out tile (f32)
    vmem_limit = int(min(max(4 * tile_bytes, 16 * 2**20), 40 * 2**20))

    out = pl.pallas_call(
        encoder_kernel,
        out_shape=jax.ShapeDtypeStruct((m_pad, n_pad), jnp.float32),
        grid_spec=pltpu.PrefetchScalarGridSpec(
            num_scalar_prefetch=0,
            grid=grid,
            in_specs=[
                # x: tiled over batch, full (aligned) feature dim.
                pl.BlockSpec((tm, k_rows), lambda i, j: (i, 0)),
                # W: tiled over output features, constant over batch -> stays
                # VMEM-resident along the M axis.
                pl.BlockSpec((k_rows, tn), lambda i, j: (0, j)),
                # bias: tiny f32 row, tiled over output features.
                pl.BlockSpec((1, tn), lambda i, j: (0, j)),
            ],
            out_specs=pl.BlockSpec((tm, tn), lambda i, j: (i, j)),
        ),
        compiler_params=pltpu.CompilerParams(
            dimension_semantics=("parallel", "parallel"),
            vmem_limit_bytes=vmem_limit,
        ),
    )(x, w_packed, b_packed)

    # TODO(synk): when n_out << 128 and the kernel is writeback-bound, compare a
    # masked n_out-wide store vs this lane-dense padded store, and let the
    # consumer fuse the [:batch, :n_out] slice instead of materializing it here.
    return out[:batch, :n_out]


def init_encoder_params(key, input_size, output_size):
    """Mimic nn.Linear init: U(-1/sqrt(fan_in), 1/sqrt(fan_in)); W stored as (in, out)."""
    kw, kb = jax.random.split(key)
    bound = 1.0 / jnp.sqrt(float(input_size))
    w = jax.random.uniform(kw, (input_size, output_size), jnp.float32, -bound, bound)
    b = jax.random.uniform(kb, (output_size,), jnp.float32, -bound, bound)
    return w, b


if __name__ == "__main__":
    # Small shapes consistent with the module: batch=2, input_size=32, output_size=8.
    batch, input_size, output_size = 2, 32, 8

    key = jax.random.PRNGKey(0)
    k_x, k_p = jax.random.split(key)

    x = jax.random.normal(k_x, (batch, input_size), dtype=jnp.float32)
    w, b = init_encoder_params(k_p, input_size, output_size)

    # One-time host-side packing / padding of the parameters (bf16 W, f32 bias).
    w_packed, b_packed = pack_encoder_params(w, b)

    out = encoder_forward(x, w_packed, b_packed, output_size)
    out = jax.block_until_ready(out)

    # Reference with the same bf16 operand quantization (f32 accumulation):
    ref_bf16 = jnp.maximum(
        jnp.dot(x.astype(jnp.bfloat16), w.astype(jnp.bfloat16),
                preferred_element_type=jnp.float32) + b[None, :], 0.0)
    # Pure-f32 torch-equivalent reference (loose tolerance due to bf16 operands).
    ref_f32 = jnp.maximum(x @ w + b[None, :], 0.0)

    assert out.shape == (batch, output_size)
    assert jnp.allclose(out, ref_bf16, atol=1e-3, rtol=1e-3)
    assert jnp.allclose(out, ref_f32, atol=5e-2, rtol=5e-2)

    print("KERNEL_OK")
</pallas_src>

<mosaic_0001>
module attributes {stable_mosaic.version = 11 : i64} {
  func.func @encoder_kernel(%arg0: i32, %arg1: i32, %arg2: memref<8x32xf32, #tpu.memory_space<vmem>>, %arg3: memref<32x128xbf16, #tpu.memory_space<vmem>>, %arg4: memref<1x128xf32, #tpu.memory_space<vmem>>, %arg5: memref<8x128xf32, #tpu.memory_space<vmem>>) attributes {dimension_semantics = [#tpu.dimension_semantics<parallel>, #tpu.dimension_semantics<parallel>], iteration_bounds = array<i64: 1, 1>, scalar_prefetch = 0 : i64, scratch_operands = 0 : i64, tpu.core_type = #tpu.core_type<tc>, window_params = [{transform_indices = @transform_0, window_bounds = array<i64: 8, 32>}, {transform_indices = @transform_1, window_bounds = array<i64: 32, 128>}, {transform_indices = @transform_2, window_bounds = array<i64: 1, 128>}, {transform_indices = @transform_3, window_bounds = array<i64: 8, 128>}]} {
    %c0 = arith.constant 0 : index
    %c0_0 = arith.constant 0 : index
    %0 = vector.load %arg2[%c0, %c0_0] : memref<8x32xf32, #tpu.memory_space<vmem>>, vector<8x32xf32>
    %1 = arith.truncf %0 : vector<8x32xf32> to vector<8x32xbf16>
    %c0_1 = arith.constant 0 : index
    %c0_2 = arith.constant 0 : index
    %2 = vector.load %arg3[%c0_1, %c0_2] : memref<32x128xbf16, #tpu.memory_space<vmem>>, vector<32x128xbf16>
    %cst = arith.constant dense<0.000000e+00> : vector<8x128xf32>
    %3 = tpu.matmul %1, %2, %cst {dimension_numbers = #tpu.dot_dimension_numbers<[1], [0], [0], [1], [0, 0, 1, 1], [], []>} : vector<8x32xbf16>, vector<32x128xbf16>, vector<8x128xf32> -> vector<8x128xf32>
    %c0_3 = arith.constant 0 : index
    %c0_4 = arith.constant 0 : index
    %4 = vector.load %arg4[%c0_3, %c0_4] : memref<1x128xf32, #tpu.memory_space<vmem>>, vector<1x128xf32>
    %5 = vector.broadcast %4 : vector<1x128xf32> to vector<8x128xf32>
    %6 = arith.addf %3, %5 : vector<8x128xf32>
    %cst_5 = arith.constant 0.000000e+00 : f32
    %7 = vector.broadcast %cst_5 : f32 to vector<8x128xf32>
    %8 = arith.maximumf %6, %7 : vector<8x128xf32>
    %c0_6 = arith.constant 0 : index
    %c0_7 = arith.constant 0 : index
    %9 = vector.load %arg5[%c0_6, %c0_7] : memref<8x128xf32, #tpu.memory_space<vmem>>, vector<8x128xf32>
    tpu.vector_store %arg5[%c0_6, %c0_7], %8 {strides = array<i32>} : memref<8x128xf32, #tpu.memory_space<vmem>>, vector<8x128xf32>,
    return
  }
  func.func @transform_0(%arg0: i32, %arg1: i32) -> (i32, i32) {
    %c0_i32 = arith.constant 0 : i32
    %c0_i32_0 = arith.constant 0 : i32
    return %arg0, %c0_i32 : i32, i32
  }
  func.func @transform_1(%arg0: i32, %arg1: i32) -> (i32, i32) {
    %c0_i32 = arith.constant 0 : i32
    %c0_i32_0 = arith.constant 0 : i32
    return %c0_i32, %arg1 : i32, i32
  }
  func.func @transform_2(%arg0: i32, %arg1: i32) -> (i32, i32) {
    %c0_i32 = arith.constant 0 : i32
    %c0_i32_0 = arith.constant 0 : i32
    return %c0_i32, %arg1 : i32, i32
  }
  func.func @transform_3(%arg0: i32, %arg1: i32) -> (i32, i32) {
    %c0_i32 = arith.constant 0 : i32
    return %arg0, %arg1 : i32, i32
  }
}

</mosaic_0001>

<llo_original>
// kernel: tpu_custom_call.1
$region0: #{tpu_custom_call.1}
  #allocation0 [shape = 'u32[]', space=smem, size = 0x4, offset = 0x4, fixed_abs, tag = 'smem constant byte address 0x4 - core index']
  #allocation1 [shape = 'u32[144,128]{1,0:T(1,128)}', space=vmem, size = 0x12000, scoped, tag = 'internal scratch']
  %s0 = inlined_call_operand.hbm [shape: f32[8,32], index: 0, kind: input, shape index: {}]
  %s1 = inlined_call_operand.hbm [shape: bf16[32,128], index: 1, kind: input, shape index: {}]
  %s2 = inlined_call_operand.vmem [shape: f32[1,128], index: 2, kind: input, shape index: {}]
  %s3 = inlined_call_operand.hbm [shape: f32[8,128], index: 3, kind: output, shape index: {}]
  %s4 = sld [smem:[#allocation0]]
  $region30: #{tpu_custom_call.1} parent=0
    _
  %s6 = ssub.s32 1, %s4
  %s7 = scalar_select 0, %s6, %s4
  $region1: #{tpu_custom_call.1} parent=0
    #allocation2 [shape = 'u8[4096]{0}', space=vmem, size = 0x1000, scoped, tag = 'input window, operand 0, single buffered']
    #allocation3 [shape = 's32[1]{0}', space=sflag, size = 0x4, scoped, tag = 'scoped memory for tpu_custom_call.1']
    #allocation4 [shape = 's32[1]{0}', space=sflag, size = 0x4, scoped, tag = 'scoped memory for tpu_custom_call.1']
    #allocation5 [shape = 'u8[8192]{0}', space=vmem, size = 0x2000, scoped, tag = 'input window, operand 1, single buffered']
    #allocation6 [shape = 's32[1]{0}', space=sflag, size = 0x4, scoped, tag = 'scoped memory for tpu_custom_call.1']
    #allocation7 [shape = 'u8[4096]{0}', space=vmem, size = 0x1000, scoped, tag = 'output window, operand 0, single buffered']
    %8 = vsyncpa [#allocation3], 0
    %9 = vsyncpa [#allocation6], 0
    %10 = vsyncpa [#allocation4], 0
    // Predicated region
    $region2: #{tpu_custom_call.1} parent=1 // pred_check
      _
    $region3: #{tpu_custom_call.1} parent=1 // pred_check_branch
      %12 = sbr.rel (0) target = $region5
    $region4: #{tpu_custom_call.1} parent=1 // pred_region
      %s14 = ssub.s32 128, 128
      %15 = vsyncadd [#allocation3], %s14
      %s17 = sshll.u32 [#allocation2], 4
      %s18 = int_to_ptr.vmem [resolvable:$true] %s17
      %20 = dma.hbm_to_vmem [thread:$0]  %s0, 128, %s18, [#allocation3]
    $region5: #{tpu_custom_call.1} parent=1 // pred_fallthru
      _
    // Predicated region
    $region6: #{tpu_custom_call.1} parent=1 // pred_check
      _
    $region7: #{tpu_custom_call.1} parent=1 // pred_check_branch
      %22 = sbr.rel (0) target = $region9
    $region8: #{tpu_custom_call.1} parent=1 // pred_region
      %s24 = ssub.s32 256, 256
      %25 = vsyncadd [#allocation6], %s24
      %s26 = sshll.u32 [#allocation5], 4
      %s27 = int_to_ptr.vmem [resolvable:$true] %s26
      %32 = dma.hbm_to_vmem [thread:$0]  %s1, 256, %s27, [#allocation6], 64, 64, 4
    $region9: #{tpu_custom_call.1} parent=1 // pred_fallthru
      _
    // Predicated region
    $region10: #{tpu_custom_call.1} parent=1 // pred_check
      _
    $region11: #{tpu_custom_call.1} parent=1 // pred_check_branch
      %34 = sbr.rel (0) target = $region13
    $region12: #{tpu_custom_call.1} parent=1 // pred_region
      _
    $region13: #{tpu_custom_call.1} parent=1 // pred_fallthru
      _
    // Predicated region
    $region14: #{tpu_custom_call.1} parent=1 // pred_check
      _
    $region15: #{tpu_custom_call.1} parent=1 // pred_check_branch
      %36 = sbr.rel (0) target = $region17
    $region16: #{tpu_custom_call.1} parent=1 // pred_region
      %37 = dma.done [#allocation3], 128
    $region17: #{tpu_custom_call.1} parent=1 // pred_fallthru
      _
    // Predicated region
    $region18: #{tpu_custom_call.1} parent=1 // pred_check
      _
    $region19: #{tpu_custom_call.1} parent=1 // pred_check_branch
      %39 = sbr.rel (0) target = $region21
    $region20: #{tpu_custom_call.1} parent=1 // pred_region
      %40 = dma.done [#allocation6], 256
    $region21: #{tpu_custom_call.1} parent=1 // pred_fallthru
      _
    %v42 = vld [vmem:[#allocation2] sm:$0xff]
    %v43 = vpack.c.bf16 %v42, %v42
    %v44 = vld [vmem:[#allocation5] sm:$0xf]
    %v45 = vld [vmem:[#allocation5 + $0x4] sm:$0xf]
    %v46 = vld [vmem:[#allocation5 + $0x8] sm:$0xf]
    %v47 = vld [vmem:[#allocation5 + $0xc] sm:$0xf]
    %v48 = vld [vmem:[%s2] sm:$0x1]
    %v50 = vlaneseq
    %v51 = vshrl.u32 %v50, 7
    %v52 = vsub.s32 0, %v51
    %v53 = vrot.slane %v48, %v52
    %v59 = vunpack.c.l.b16 %v44
    %v60 = vunpack.c.l.b16 %v45
    %v61 = vunpack.c.l.b16 %v46
    %v62 = vunpack.c.l.b16 %v47
    %v63 = vpack.c.b16 %v60, %v59
    %v64 = vpack.c.b16 %v62, %v61
    %vm67 = vcmask 261120
    %v69 = vsel %vm67, %v43, 0
    %71 = vmatprep.subr.bf16.mxu0 0
    %72 = vmatpush1.bf16.msra.mxu0 %v63
    %73 = vmatprep.subr.bf16.mxu0 0
    %74 = vmatpush1.bf16.msra.mxu0 %v64
    %75 = vmatprep.subr.bf16.mxu0 0
    %76 = vmatpush1.bf16.msra.mxu0 0
    %77 = vmatprep.subr.bf16.mxu0 0
    %78 = vmatpush1.bf16.msra.mxu0 0
    %79 = vmatprep.subr.bf16.mxu0 0
    %80 = vmatpush1.bf16.msra.mxu0 0
    %81 = vmatprep.subr.bf16.mxu0 0
    %82 = vmatpush1.bf16.msra.mxu0 0
    %83 = vmatprep.subr.bf16.mxu0 0
    %84 = vmatpush1.bf16.msra.mxu0 0
    %85 = vmatprep.subr.bf16.mxu0 0
    %86 = vmatpush1.bf16.msra.mxu0 0
    %87 = vmatprep.subr.bf16.mxu0 0
    %88 = vmatpush1.bf16.msra.mxu0 0
    %89 = vmatprep.subr.bf16.mxu0 0
    %90 = vmatpush1.bf16.msra.mxu0 0
    %91 = vmatprep.subr.bf16.mxu0 0
    %92 = vmatpush1.bf16.msra.mxu0 0
    %93 = vmatprep.subr.bf16.mxu0 0
    %94 = vmatpush1.bf16.msra.mxu0 0
    %95 = vmatprep.subr.bf16.mxu0 0
    %96 = vmatpush1.bf16.msra.mxu0 0
    %97 = vmatprep.subr.bf16.mxu0 0
    %98 = vmatpush1.bf16.msra.mxu0 0
    %99 = vmatprep.subr.bf16.mxu0 0
    %100 = vmatpush1.bf16.msra.mxu0 0
    %101 = vmatprep.subr.bf16.mxu0 0
    %102 = vmatpush1.bf16.msra.mxu0 0
    %103 = vmatprep.mubr.bf16.mxu0 0
    %104 = vmatmul.mubr.bf16.gmra.mrb[0].mxu0 %v69
    %v105 = vpop.f32.mrb[0].mxu0
    %v106 = vadd.f32 %v53, %v105
    %v107 = vpop.f32.mrb[0].mxu0
    %v108 = vpop.f32.mrb[0].mxu0
    %v109 = vpop.f32.mrb[0].mxu0
    %110 = vdwg.mxu0
    %v111 = vmax.f32 %v106, 0.0
    %112 = vst [vmem:[#allocation7] sm:$0xff] %v111
    // Predicated region
    $region22: #{tpu_custom_call.1} parent=1 // pred_check
      _
    $region23: #{tpu_custom_call.1} parent=1 // pred_check_branch
      %114 = sbr.rel (0) target = $region25
    $region24: #{tpu_custom_call.1} parent=1 // pred_region
      %s116 = ssub.s32 128, 128
      %117 = vsyncadd [#allocation4], %s116
      %s119 = sshll.u32 [#allocation7], 4
      %s120 = int_to_ptr.vmem [resolvable:$true] %s119
      %122 = dma.vmem_to_hbm [thread:$0]  %s120, 128, %s3, [#allocation4]
    $region25: #{tpu_custom_call.1} parent=1 // pred_fallthru
      _
    // Predicated region
    $region26: #{tpu_custom_call.1} parent=1 // pred_check
      _
    $region27: #{tpu_custom_call.1} parent=1 // pred_check_branch
      %124 = sbr.rel (0) target = $region29
    $region28: #{tpu_custom_call.1} parent=1 // pred_region
      %125 = dma.done [#allocation4], 128
    $region29: #{tpu_custom_call.1} parent=1 // pred_fallthru
      _
    %126 = vsyncpa [#allocation3], 1
    %127 = vsyncpa [#allocation6], 1
    %128 = vsyncpa [#allocation4], 1

</llo_original>
